<compile_context>
chip_gen: v6e
topology: v6e:2x2x1
jax: 0.10.0
libtpu: 0.0.40
codegen_flags: <defaults>
</compile_context>

<pallas_src>
import functools

import jax
import jax.numpy as jnp
from jax.experimental import pallas as pl
from jax.experimental.pallas import tpu as pltpu

_SOBEL_EPS = 1e-6                       # kornia.filters.sobel default eps
_TARGET_BLOCK_BYTES = 2 * 1024 * 1024   # per-input block target (native dtype)
_VMEM_LIMIT_BYTES = 48 * 1024 * 1024    # explicit; safe under v7x's 64 MiB


# ----------------------------- in-kernel math ------------------------------

def _shift_rows(x, shift):
    """Replicate-padded +-1 shift along axis -2 of a (GB, H, W) block."""
    if shift == 1:      # out[:, i, :] = x[:, min(i+1, H-1), :]
        return jnp.concatenate([x[:, 1:, :], x[:, -1:, :]], axis=1)
    else:               # out[:, i, :] = x[:, max(i-1, 0), :]
        return jnp.concatenate([x[:, :1, :], x[:, :-1, :]], axis=1)


def _shift_cols(x, shift):
    """Replicate-padded +-1 shift along axis -1 (lanes) of a (GB, H, W) block."""
    if shift == 1:
        return jnp.concatenate([x[:, :, 1:], x[:, :, -1:]], axis=2)
    else:
        return jnp.concatenate([x[:, :, :1], x[:, :, :-1]], axis=2)


def _sobel_mag(x):
    """kornia.filters.sobel(x, normalized=True) per (H, W) plane of a block.

    Separable cross-correlation with Kx = [[-1,0,1],[-2,0,2],[-1,0,1]]/8,
    Ky = Kx.T, replicate padding, magnitude sqrt(gx^2 + gy^2 + eps).
    """
    up = _shift_rows(x, -1)      # x[:, i-1, :]
    down = _shift_rows(x, 1)     # x[:, i+1, :]
    left = _shift_cols(x, -1)    # x[:, :, j-1]
    right = _shift_cols(x, 1)    # x[:, :, j+1]

    d = right - left                                          # column difference
    gx = (_shift_rows(d, -1) + 2.0 * d + _shift_rows(d, 1)) * 0.125
    e = down - up                                             # row difference
    gy = (_shift_cols(e, -1) + 2.0 * e + _shift_cols(e, 1)) * 0.125
    return jnp.sqrt(gx * gx + gy * gy + _SOBEL_EPS)


def _lane_partial(term):
    """(GB, H, W) f32 -> (1, 1, W) per-lane partial sums.

    Only the plane/sublane axes are reduced in-kernel (cheap VPU adds); the
    expensive cross-lane reduction is deferred to the JAX wrapper.
    """
    return jnp.sum(term, axis=(0, 1))[None, None, :]


def _matte_kernel(*refs, with_err):
    if with_err:
        p_ref, t_ref, e_ref, a_ref, b_ref, c_ref = refs
    else:
        p_ref, t_ref, a_ref, b_ref = refs

    p = p_ref[...].astype(jnp.float32)   # (GB, H, W), upcast in vregs
    t = t_ref[...].astype(jnp.float32)

    true_err = jnp.abs(p - t)
    a_ref[...] = _lane_partial(true_err)                       # |pred - true|

    sob_diff = jnp.abs(_sobel_mag(p) - _sobel_mag(t))
    b_ref[...] = _lane_partial(sob_diff)                       # |sobel diff|

    if with_err:
        err = e_ref[...].astype(jnp.float32)
        c_ref[...] = _lane_partial(jnp.abs(err - true_err))    # |err - true_err|


# ------------------------------- JAX wrapper --------------------------------

def _planes_per_block(G, plane_bytes):
    """Largest divisor of G whose per-input block stays under the byte target."""
    want = max(1, min(G, _TARGET_BLOCK_BYTES // max(plane_bytes, 1)))
    for gb in range(want, 0, -1):
        if G % gb == 0:
            return gb
    return 1


def _matte_sums(pred_pha, true_pha, pred_err=None):
    """Means of |p-t|, |sobel(p)-sobel(t)| and (optionally) |err-|p-t||."""
    with_err = pred_err is not None
    B, C, H, W = pred_pha.shape
    G = B * C

    # Free leading-dim merges; dtype kept native (cast happens inside kernel).
    p = pred_pha.reshape(G, H, W)
    t = true_pha.reshape(G, H, W)
    inputs = [p, t]
    if with_err:
        inputs.append(pred_err.reshape(G, H, W))

    plane_bytes = H * W * p.dtype.itemsize
    GB = _planes_per_block(G, plane_bytes)
    # TODO(synk): planes larger than the ~2 MiB block budget would need row
    # tiling with a 1-row halo; whole planes are the minimum granularity here.
    num_blocks = G // GB
    n_out = 3 if with_err else 2

    in_spec = pl.BlockSpec((GB, H, W), lambda i: (i, 0, 0))
    out_spec = pl.BlockSpec((1, 1, W), lambda i: (i, 0, 0))
    out_sds = jax.ShapeDtypeStruct((num_blocks, 1, W), jnp.float32)

    partials = pl.pallas_call(
        functools.partial(_matte_kernel, with_err=with_err),
        out_shape=(out_sds,) * n_out,
        grid_spec=pltpu.PrefetchScalarGridSpec(
            num_scalar_prefetch=0,
            grid=(num_blocks,),
            in_specs=[in_spec] * len(inputs),
            out_specs=(out_spec,) * n_out,
        ),
        compiler_params=pltpu.CompilerParams(
            dimension_semantics=("parallel",),   # independent blocks -> megacore
            vmem_limit_bytes=_VMEM_LIMIT_BYTES,
        ),
    )(*inputs)

    n = jnp.float32(B * C * H * W)
    return tuple(jnp.sum(s) / n for s in partials)


class MatteLossWithErr:
    """JAX/Pallas port of MatteLoss_with_err (forward semantics only)."""

    def __init__(self, pred_err_after_e=-1):
        self.pred_err_after_e = pred_err_after_e

    def __call__(self, result, true_pha, epoch_idx=0):
        # epoch_idx replaces global_dict['trainer'].epoch_idx
        pred_pha = result['pred']
        if self.pred_err_after_e < 0 or epoch_idx < self.pred_err_after_e:
            a, b = _matte_sums(pred_pha, true_pha)          # pred_err never read
            return a + b                                    # matting_loss_L1
        a, b, c = _matte_sums(pred_pha, true_pha, result['pred_err'])
        return {'main_loss': a + b, 'pred_err_loss': c}     # matting_loss_with_err


# ---------------------------- pure-JAX reference ----------------------------

def _sobel_ref(x):
    # independent reference: explicit replicate pad + 3x3 cross-correlation
    kx = jnp.array([[-1., 0., 1.], [-2., 0., 2.], [-1., 0., 1.]]) / 8.0
    ky = kx.T
    B, C, H, W = x.shape
    xp = jnp.pad(x, ((0, 0), (0, 0), (1, 1), (1, 1)), mode='edge')
    gx = jnp.zeros_like(x)
    gy = jnp.zeros_like(x)
    for u in range(3):
        for v in range(3):
            patch = xp[:, :, u:u + H, v:v + W]
            gx = gx + kx[u, v] * patch
            gy = gy + ky[u, v] * patch
    return jnp.sqrt(gx * gx + gy * gy + _SOBEL_EPS)


def _loss_ref(pred_pha, true_pha, pred_err):
    a = jnp.mean(jnp.abs(pred_pha - true_pha))
    b = jnp.mean(jnp.abs(_sobel_ref(pred_pha) - _sobel_ref(true_pha)))
    c = jnp.mean(jnp.abs(pred_err - jnp.abs(pred_pha - true_pha)))
    return a, b, c


# ----------------------------------- main ------------------------------------

if __name__ == "__main__":
    key = jax.random.PRNGKey(0)
    k1, k2, k3 = jax.random.split(key, 3)

    B, C, H, W = 2, 1, 16, 16   # alpha matte: single channel
    pred_pha = jax.nn.sigmoid(jax.random.normal(k1, (B, C, H, W), jnp.float32))
    true_pha = jax.nn.sigmoid(jax.random.normal(k2, (B, C, H, W), jnp.float32))
    pred_err = jax.nn.sigmoid(jax.random.normal(k3, (B, C, H, W), jnp.float32)) * 0.1

    result = {'pred': pred_pha, 'pred_err': pred_err}

    # branch 1: matting_loss_L1 (2-input kernel, pred_err stream skipped)
    main_only = MatteLossWithErr(pred_err_after_e=-1)(result, true_pha, epoch_idx=0)
    main_only = jax.block_until_ready(main_only)

    # branch 2: matting_loss_with_err (3-input kernel, dict output)
    out_dict = MatteLossWithErr(pred_err_after_e=1)(result, true_pha, epoch_idx=5)
    out_dict = jax.tree_util.tree_map(jax.block_until_ready, out_dict)

    # sanity check against a pure-JAX reference
    a_ref, b_ref, c_ref = _loss_ref(pred_pha, true_pha, pred_err)
    assert jnp.allclose(main_only, a_ref + b_ref, rtol=1e-5, atol=1e-6)
    assert jnp.allclose(out_dict['main_loss'], a_ref + b_ref, rtol=1e-5, atol=1e-6)
    assert jnp.allclose(out_dict['pred_err_loss'], c_ref, rtol=1e-5, atol=1e-6)

    print("KERNEL_OK")
</pallas_src>

<mosaic_0001>
module attributes {stable_mosaic.version = 11 : i64} {
  func.func @_matte_kernel(%arg0: i32, %arg1: memref<2x16x16xf32, #tpu.memory_space<vmem>>, %arg2: memref<2x16x16xf32, #tpu.memory_space<vmem>>, %arg3: memref<1x1x16xf32, #tpu.memory_space<vmem>>, %arg4: memref<1x1x16xf32, #tpu.memory_space<vmem>>) attributes {dimension_semantics = [#tpu.dimension_semantics<parallel>], iteration_bounds = array<i64: 1>, scalar_prefetch = 0 : i64, scratch_operands = 0 : i64, tpu.core_type = #tpu.core_type<tc>, window_params = [{transform_indices = @transform_0, window_bounds = array<i64: 2, 16, 16>}, {transform_indices = @transform_1, window_bounds = array<i64: 2, 16, 16>}, {transform_indices = @transform_2, window_bounds = array<i64: 1, 1, 16>}, {transform_indices = @transform_3, window_bounds = array<i64: 1, 1, 16>}]} {
    %c0 = arith.constant 0 : index
    %c0_0 = arith.constant 0 : index
    %c0_1 = arith.constant 0 : index
    %0 = vector.load %arg1[%c0, %c0_0, %c0_1] : memref<2x16x16xf32, #tpu.memory_space<vmem>>, vector<2x16x16xf32>
    %c0_2 = arith.constant 0 : index
    %c0_3 = arith.constant 0 : index
    %c0_4 = arith.constant 0 : index
    %1 = vector.load %arg2[%c0_2, %c0_3, %c0_4] : memref<2x16x16xf32, #tpu.memory_space<vmem>>, vector<2x16x16xf32>
    %2 = arith.subf %0, %1 : vector<2x16x16xf32>
    %3 = math.absf %2 : vector<2x16x16xf32>
    %cst = arith.constant dense<0.000000e+00> : vector<16xf32>
    %4 = vector.multi_reduction <add>, %3, %cst [0, 1] : vector<2x16x16xf32> to vector<16xf32>
    %5 = vector.shape_cast %4 : vector<16xf32> to vector<1x1x16xf32>
    %c0_5 = arith.constant 0 : index
    %c0_6 = arith.constant 0 : index
    %c0_7 = arith.constant 0 : index
    %6 = vector.load %arg3[%c0_5, %c0_6, %c0_7] : memref<1x1x16xf32, #tpu.memory_space<vmem>>, vector<1x1x16xf32>
    tpu.vector_store %arg3[%c0_5, %c0_6, %c0_7], %5 {strides = array<i32>} : memref<1x1x16xf32, #tpu.memory_space<vmem>>, vector<1x1x16xf32>,
    %7 = vector.extract_strided_slice %0 {offsets = [0, 0, 0], sizes = [2, 1, 16], strides = [1, 1, 1]} : vector<2x16x16xf32> to vector<2x1x16xf32>
    %8 = vector.extract_strided_slice %0 {offsets = [0, 0, 0], sizes = [2, 15, 16], strides = [1, 1, 1]} : vector<2x16x16xf32> to vector<2x15x16xf32>
    %9 = tpu.concatenate %7, %8 in 1 : vector<2x1x16xf32>, vector<2x15x16xf32> -> vector<2x16x16xf32>
    %10 = vector.extract_strided_slice %0 {offsets = [0, 1, 0], sizes = [2, 15, 16], strides = [1, 1, 1]} : vector<2x16x16xf32> to vector<2x15x16xf32>
    %11 = vector.extract_strided_slice %0 {offsets = [0, 15, 0], sizes = [2, 1, 16], strides = [1, 1, 1]} : vector<2x16x16xf32> to vector<2x1x16xf32>
    %12 = tpu.concatenate %10, %11 in 1 : vector<2x15x16xf32>, vector<2x1x16xf32> -> vector<2x16x16xf32>
    %13 = vector.extract_strided_slice %0 {offsets = [0, 0, 0], sizes = [2, 16, 1], strides = [1, 1, 1]} : vector<2x16x16xf32> to vector<2x16x1xf32>
    %14 = vector.extract_strided_slice %0 {offsets = [0, 0, 0], sizes = [2, 16, 15], strides = [1, 1, 1]} : vector<2x16x16xf32> to vector<2x16x15xf32>
    %15 = tpu.concatenate %13, %14 in 2 : vector<2x16x1xf32>, vector<2x16x15xf32> -> vector<2x16x16xf32>
    %16 = vector.extract_strided_slice %0 {offsets = [0, 0, 1], sizes = [2, 16, 15], strides = [1, 1, 1]} : vector<2x16x16xf32> to vector<2x16x15xf32>
    %17 = vector.extract_strided_slice %0 {offsets = [0, 0, 15], sizes = [2, 16, 1], strides = [1, 1, 1]} : vector<2x16x16xf32> to vector<2x16x1xf32>
    %18 = tpu.concatenate %16, %17 in 2 : vector<2x16x15xf32>, vector<2x16x1xf32> -> vector<2x16x16xf32>
    %19 = arith.subf %18, %15 : vector<2x16x16xf32>
    %20 = vector.extract_strided_slice %19 {offsets = [0, 0, 0], sizes = [2, 1, 16], strides = [1, 1, 1]} : vector<2x16x16xf32> to vector<2x1x16xf32>
    %21 = vector.extract_strided_slice %19 {offsets = [0, 0, 0], sizes = [2, 15, 16], strides = [1, 1, 1]} : vector<2x16x16xf32> to vector<2x15x16xf32>
    %22 = tpu.concatenate %20, %21 in 1 : vector<2x1x16xf32>, vector<2x15x16xf32> -> vector<2x16x16xf32>
    %cst_8 = arith.constant 2.000000e+00 : f32
    %23 = vector.broadcast %cst_8 : f32 to vector<2x16x16xf32>
    %24 = arith.mulf %23, %19 : vector<2x16x16xf32>
    %25 = arith.addf %22, %24 : vector<2x16x16xf32>
    %26 = vector.extract_strided_slice %19 {offsets = [0, 1, 0], sizes = [2, 15, 16], strides = [1, 1, 1]} : vector<2x16x16xf32> to vector<2x15x16xf32>
    %27 = vector.extract_strided_slice %19 {offsets = [0, 15, 0], sizes = [2, 1, 16], strides = [1, 1, 1]} : vector<2x16x16xf32> to vector<2x1x16xf32>
    %28 = tpu.concatenate %26, %27 in 1 : vector<2x15x16xf32>, vector<2x1x16xf32> -> vector<2x16x16xf32>
    %29 = arith.addf %25, %28 : vector<2x16x16xf32>
    %cst_9 = arith.constant 1.250000e-01 : f32
    %30 = vector.broadcast %cst_9 : f32 to vector<2x16x16xf32>
    %31 = arith.mulf %29, %30 : vector<2x16x16xf32>
    %32 = arith.subf %12, %9 : vector<2x16x16xf32>
    %33 = vector.extract_strided_slice %32 {offsets = [0, 0, 0], sizes = [2, 16, 1], strides = [1, 1, 1]} : vector<2x16x16xf32> to vector<2x16x1xf32>
    %34 = vector.extract_strided_slice %32 {offsets = [0, 0, 0], sizes = [2, 16, 15], strides = [1, 1, 1]} : vector<2x16x16xf32> to vector<2x16x15xf32>
    %35 = tpu.concatenate %33, %34 in 2 : vector<2x16x1xf32>, vector<2x16x15xf32> -> vector<2x16x16xf32>
    %cst_10 = arith.constant 2.000000e+00 : f32
    %36 = vector.broadcast %cst_10 : f32 to vector<2x16x16xf32>
    %37 = arith.mulf %36, %32 : vector<2x16x16xf32>
    %38 = arith.addf %35, %37 : vector<2x16x16xf32>
    %39 = vector.extract_strided_slice %32 {offsets = [0, 0, 1], sizes = [2, 16, 15], strides = [1, 1, 1]} : vector<2x16x16xf32> to vector<2x16x15xf32>
    %40 = vector.extract_strided_slice %32 {offsets = [0, 0, 15], sizes = [2, 16, 1], strides = [1, 1, 1]} : vector<2x16x16xf32> to vector<2x16x1xf32>
    %41 = tpu.concatenate %39, %40 in 2 : vector<2x16x15xf32>, vector<2x16x1xf32> -> vector<2x16x16xf32>
    %42 = arith.addf %38, %41 : vector<2x16x16xf32>
    %cst_11 = arith.constant 1.250000e-01 : f32
    %43 = vector.broadcast %cst_11 : f32 to vector<2x16x16xf32>
    %44 = arith.mulf %42, %43 : vector<2x16x16xf32>
    %45 = arith.mulf %31, %31 : vector<2x16x16xf32>
    %46 = arith.mulf %44, %44 : vector<2x16x16xf32>
    %47 = arith.addf %45, %46 : vector<2x16x16xf32>
    %cst_12 = arith.constant 9.99999997E-7 : f32
    %48 = vector.broadcast %cst_12 : f32 to vector<2x16x16xf32>
    %49 = arith.addf %47, %48 : vector<2x16x16xf32>
    %50 = math.sqrt %49 : vector<2x16x16xf32>
    %51 = vector.extract_strided_slice %1 {offsets = [0, 0, 0], sizes = [2, 1, 16], strides = [1, 1, 1]} : vector<2x16x16xf32> to vector<2x1x16xf32>
    %52 = vector.extract_strided_slice %1 {offsets = [0, 0, 0], sizes = [2, 15, 16], strides = [1, 1, 1]} : vector<2x16x16xf32> to vector<2x15x16xf32>
    %53 = tpu.concatenate %51, %52 in 1 : vector<2x1x16xf32>, vector<2x15x16xf32> -> vector<2x16x16xf32>
    %54 = vector.extract_strided_slice %1 {offsets = [0, 1, 0], sizes = [2, 15, 16], strides = [1, 1, 1]} : vector<2x16x16xf32> to vector<2x15x16xf32>
    %55 = vector.extract_strided_slice %1 {offsets = [0, 15, 0], sizes = [2, 1, 16], strides = [1, 1, 1]} : vector<2x16x16xf32> to vector<2x1x16xf32>
    %56 = tpu.concatenate %54, %55 in 1 : vector<2x15x16xf32>, vector<2x1x16xf32> -> vector<2x16x16xf32>
    %57 = vector.extract_strided_slice %1 {offsets = [0, 0, 0], sizes = [2, 16, 1], strides = [1, 1, 1]} : vector<2x16x16xf32> to vector<2x16x1xf32>
    %58 = vector.extract_strided_slice %1 {offsets = [0, 0, 0], sizes = [2, 16, 15], strides = [1, 1, 1]} : vector<2x16x16xf32> to vector<2x16x15xf32>
    %59 = tpu.concatenate %57, %58 in 2 : vector<2x16x1xf32>, vector<2x16x15xf32> -> vector<2x16x16xf32>
    %60 = vector.extract_strided_slice %1 {offsets = [0, 0, 1], sizes = [2, 16, 15], strides = [1, 1, 1]} : vector<2x16x16xf32> to vector<2x16x15xf32>
    %61 = vector.extract_strided_slice %1 {offsets = [0, 0, 15], sizes = [2, 16, 1], strides = [1, 1, 1]} : vector<2x16x16xf32> to vector<2x16x1xf32>
    %62 = tpu.concatenate %60, %61 in 2 : vector<2x16x15xf32>, vector<2x16x1xf32> -> vector<2x16x16xf32>
    %63 = arith.subf %62, %59 : vector<2x16x16xf32>
    %64 = vector.extract_strided_slice %63 {offsets = [0, 0, 0], sizes = [2, 1, 16], strides = [1, 1, 1]} : vector<2x16x16xf32> to vector<2x1x16xf32>
    %65 = vector.extract_strided_slice %63 {offsets = [0, 0, 0], sizes = [2, 15, 16], strides = [1, 1, 1]} : vector<2x16x16xf32> to vector<2x15x16xf32>
    %66 = tpu.concatenate %64, %65 in 1 : vector<2x1x16xf32>, vector<2x15x16xf32> -> vector<2x16x16xf32>
    %cst_13 = arith.constant 2.000000e+00 : f32
    %67 = vector.broadcast %cst_13 : f32 to vector<2x16x16xf32>
    %68 = arith.mulf %67, %63 : vector<2x16x16xf32>
    %69 = arith.addf %66, %68 : vector<2x16x16xf32>
    %70 = vector.extract_strided_slice %63 {offsets = [0, 1, 0], sizes = [2, 15, 16], strides = [1, 1, 1]} : vector<2x16x16xf32> to vector<2x15x16xf32>
    %71 = vector.extract_strided_slice %63 {offsets = [0, 15, 0], sizes = [2, 1, 16], strides = [1, 1, 1]} : vector<2x16x16xf32> to vector<2x1x16xf32>
    %72 = tpu.concatenate %70, %71 in 1 : vector<2x15x16xf32>, vector<2x1x16xf32> -> vector<2x16x16xf32>
    %73 = arith.addf %69, %72 : vector<2x16x16xf32>
    %cst_14 = arith.constant 1.250000e-01 : f32
    %74 = vector.broadcast %cst_14 : f32 to vector<2x16x16xf32>
    %75 = arith.mulf %73, %74 : vector<2x16x16xf32>
    %76 = arith.subf %56, %53 : vector<2x16x16xf32>
    %77 = vector.extract_strided_slice %76 {offsets = [0, 0, 0], sizes = [2, 16, 1], strides = [1, 1, 1]} : vector<2x16x16xf32> to vector<2x16x1xf32>
    %78 = vector.extract_strided_slice %76 {offsets = [0, 0, 0], sizes = [2, 16, 15], strides = [1, 1, 1]} : vector<2x16x16xf32> to vector<2x16x15xf32>
    %79 = tpu.concatenate %77, %78 in 2 : vector<2x16x1xf32>, vector<2x16x15xf32> -> vector<2x16x16xf32>
    %cst_15 = arith.constant 2.000000e+00 : f32
    %80 = vector.broadcast %cst_15 : f32 to vector<2x16x16xf32>
    %81 = arith.mulf %80, %76 : vector<2x16x16xf32>
    %82 = arith.addf %79, %81 : vector<2x16x16xf32>
    %83 = vector.extract_strided_slice %76 {offsets = [0, 0, 1], sizes = [2, 16, 15], strides = [1, 1, 1]} : vector<2x16x16xf32> to vector<2x16x15xf32>
    %84 = vector.extract_strided_slice %76 {offsets = [0, 0, 15], sizes = [2, 16, 1], strides = [1, 1, 1]} : vector<2x16x16xf32> to vector<2x16x1xf32>
    %85 = tpu.concatenate %83, %84 in 2 : vector<2x16x15xf32>, vector<2x16x1xf32> -> vector<2x16x16xf32>
    %86 = arith.addf %82, %85 : vector<2x16x16xf32>
    %cst_16 = arith.constant 1.250000e-01 : f32
    %87 = vector.broadcast %cst_16 : f32 to vector<2x16x16xf32>
    %88 = arith.mulf %86, %87 : vector<2x16x16xf32>
    %89 = arith.mulf %75, %75 : vector<2x16x16xf32>
    %90 = arith.mulf %88, %88 : vector<2x16x16xf32>
    %91 = arith.addf %89, %90 : vector<2x16x16xf32>
    %cst_17 = arith.constant 9.99999997E-7 : f32
    %92 = vector.broadcast %cst_17 : f32 to vector<2x16x16xf32>
    %93 = arith.addf %91, %92 : vector<2x16x16xf32>
    %94 = math.sqrt %93 : vector<2x16x16xf32>
    %95 = arith.subf %50, %94 : vector<2x16x16xf32>
    %96 = math.absf %95 : vector<2x16x16xf32>
    %cst_18 = arith.constant dense<0.000000e+00> : vector<16xf32>
    %97 = vector.multi_reduction <add>, %96, %cst_18 [0, 1] : vector<2x16x16xf32> to vector<16xf32>
    %98 = vector.shape_cast %97 : vector<16xf32> to vector<1x1x16xf32>
    %c0_19 = arith.constant 0 : index
    %c0_20 = arith.constant 0 : index
    %c0_21 = arith.constant 0 : index
    %99 = vector.load %arg4[%c0_19, %c0_20, %c0_21] : memref<1x1x16xf32, #tpu.memory_space<vmem>>, vector<1x1x16xf32>
    tpu.vector_store %arg4[%c0_19, %c0_20, %c0_21], %98 {strides = array<i32>} : memref<1x1x16xf32, #tpu.memory_space<vmem>>, vector<1x1x16xf32>,
    return
  }
  func.func @transform_0(%arg0: i32) -> (i32, i32, i32) {
    %c0_i32 = arith.constant 0 : i32
    %c0_i32_0 = arith.constant 0 : i32
    %c0_i32_1 = arith.constant 0 : i32
    return %arg0, %c0_i32, %c0_i32_0 : i32, i32, i32
  }
  func.func @transform_1(%arg0: i32) -> (i32, i32, i32) {
    %c0_i32 = arith.constant 0 : i32
    %c0_i32_0 = arith.constant 0 : i32
    %c0_i32_1 = arith.constant 0 : i32
    return %arg0, %c0_i32, %c0_i32_0 : i32, i32, i32
  }
  func.func @transform_2(%arg0: i32) -> (i32, i32, i32) {
    %c0_i32 = arith.constant 0 : i32
    %c0_i32_0 = arith.constant 0 : i32
    %c0_i32_1 = arith.constant 0 : i32
    return %arg0, %c0_i32, %c0_i32_0 : i32, i32, i32
  }
  func.func @transform_3(%arg0: i32) -> (i32, i32, i32) {
    %c0_i32 = arith.constant 0 : i32
    %c0_i32_0 = arith.constant 0 : i32
    %c0_i32_1 = arith.constant 0 : i32
    return %arg0, %c0_i32, %c0_i32_0 : i32, i32, i32
  }
}

</mosaic_0001>

<llo_original>
// kernel: tpu_custom_call.1
$region0: #{tpu_custom_call.1}
  #allocation0 [shape = 'u32[]', space=smem, size = 0x4, offset = 0x4, fixed_abs, tag = 'smem constant byte address 0x4 - core index']
  #allocation1 [shape = 'u32[144,128]{1,0:T(1,128)}', space=vmem, size = 0x12000, scoped, tag = 'internal scratch']
  %s0 = inlined_call_operand.hbm [shape: f32[2,16,16], index: 0, kind: input, shape index: {}]
  %s1 = inlined_call_operand.hbm [shape: f32[2,16,16], index: 1, kind: input, shape index: {}]
  %s2 = inlined_call_operand.hbm [shape: f32[1,1,16], index: 2, kind: output, shape index: {0}]
  %s3 = inlined_call_operand.hbm [shape: f32[1,1,16], index: 3, kind: output, shape index: {1}]
  %4 = xla_tuple %s2, %s3
  %s5 = sld [smem:[#allocation0]]
  $region34: #{tpu_custom_call.1} parent=0
    _
  %s7 = ssub.s32 1, %s5
  %s8 = scalar_select 0, %s7, %s5
  $region1: #{tpu_custom_call.1} parent=0
    #allocation2 [shape = 'u8[16384]{0}', space=vmem, size = 0x4000, scoped, tag = 'input window, operand 0, single buffered']
    #allocation3 [shape = 's32[1]{0}', space=sflag, size = 0x4, scoped, tag = 'scoped memory for tpu_custom_call.1']
    #allocation4 [shape = 's32[1]{0}', space=sflag, size = 0x4, scoped, tag = 'scoped memory for tpu_custom_call.1']
    #allocation5 [shape = 'u8[16384]{0}', space=vmem, size = 0x4000, scoped, tag = 'input window, operand 1, single buffered']
    #allocation6 [shape = 's32[1]{0}', space=sflag, size = 0x4, scoped, tag = 'scoped memory for tpu_custom_call.1']
    #allocation7 [shape = 'u8[512]{0}', space=vmem, size = 0x400, scoped, tag = 'output window, operand 0, single buffered']
    #allocation8 [shape = 'u8[512]{0}', space=vmem, size = 0x400, scoped, tag = 'output window, operand 1, single buffered']
    #allocation9 [shape = 's32[1]{0}', space=sflag, size = 0x4, scoped, tag = 'scoped memory for tpu_custom_call.1']
    %9 = vsyncpa [#allocation3], 0
    %10 = vsyncpa [#allocation6], 0
    %11 = vsyncpa [#allocation4], 0
    %12 = vsyncpa [#allocation9], 0
    // Predicated region
    $region2: #{tpu_custom_call.1} parent=1 // pred_check
      _
    $region3: #{tpu_custom_call.1} parent=1 // pred_check_branch
      %14 = sbr.rel (0) target = $region5
    $region4: #{tpu_custom_call.1} parent=1 // pred_region
      %s16 = ssub.s32 512, 512
      %17 = vsyncadd [#allocation3], %s16
      %s18 = sshll.u32 [#allocation2], 4
      %s19 = int_to_ptr.vmem [resolvable:$true] %s18
      %24 = dma.hbm_to_vmem [thread:$0]  %s0, 512, %s19, [#allocation3], 128, 128, 8
    $region5: #{tpu_custom_call.1} parent=1 // pred_fallthru
      _
    // Predicated region
    $region6: #{tpu_custom_call.1} parent=1 // pred_check
      _
    $region7: #{tpu_custom_call.1} parent=1 // pred_check_branch
      %26 = sbr.rel (0) target = $region9
    $region8: #{tpu_custom_call.1} parent=1 // pred_region
      %s28 = ssub.s32 512, 512
      %29 = vsyncadd [#allocation6], %s28
      %s30 = sshll.u32 [#allocation5], 4
      %s31 = int_to_ptr.vmem [resolvable:$true] %s30
      %36 = dma.hbm_to_vmem [thread:$0]  %s1, 512, %s31, [#allocation6], 128, 128, 8
    $region9: #{tpu_custom_call.1} parent=1 // pred_fallthru
      _
    // Predicated region
    $region10: #{tpu_custom_call.1} parent=1 // pred_check
      _
    $region11: #{tpu_custom_call.1} parent=1 // pred_check_branch
      %38 = sbr.rel (0) target = $region13
    $region12: #{tpu_custom_call.1} parent=1 // pred_region
      %39 = dma.done [#allocation3], 512
    $region13: #{tpu_custom_call.1} parent=1 // pred_fallthru
      _
    // Predicated region
    $region14: #{tpu_custom_call.1} parent=1 // pred_check
      _
    $region15: #{tpu_custom_call.1} parent=1 // pred_check_branch
      %41 = sbr.rel (0) target = $region17
    $region16: #{tpu_custom_call.1} parent=1 // pred_region
      %42 = dma.done [#allocation6], 512
    $region17: #{tpu_custom_call.1} parent=1 // pred_fallthru
      _
    %v43 = vld [vmem:[#allocation2] sm:$0xff]
    %v44 = vld [vmem:[#allocation2 + $0x8] sm:$0xff]
    %v45 = vld [vmem:[#allocation2 + $0x10] sm:$0xff]
    %v46 = vld [vmem:[#allocation2 + $0x18] sm:$0xff]
    %v47 = vld [vmem:[#allocation5] sm:$0xff]
    %v48 = vld [vmem:[#allocation5 + $0x8] sm:$0xff]
    %v49 = vld [vmem:[#allocation5 + $0x10] sm:$0xff]
    %v50 = vld [vmem:[#allocation5 + $0x18] sm:$0xff]
    %v51 = vsub.f32 %v43, %v47
    %v52 = vsub.f32 %v44, %v48
    %v53 = vsub.f32 %v45, %v49
    %v54 = vsub.f32 %v46, %v50
    %v55 = vand.u32 2147483647, %v51
    %v56 = vand.u32 2147483647, %v52
    %v57 = vand.u32 2147483647, %v53
    %v58 = vand.u32 2147483647, %v54
    %vm59 = vcmask 130048
    %v60 = vsel %vm59, %v55, 0.0
    %v61 = vsel %vm59, %v56, 0.0
    %v62 = vadd.f32 %v60, %v61
    %v63 = vsel %vm59, %v57, 0.0
    %v64 = vadd.f32 %v62, %v63
    %v65 = vsel %vm59, %v58, 0.0
    %v66 = vadd.f32 %v64, %v65
    %v67 = vrot.slane %v66, 4
    %v68 = vadd.f32 %v66, %v67
    %v69 = vrot.slane %v68, 2
    %v70 = vadd.f32 %v68, %v69
    %v71 = vrot.slane %v70, 1
    %v72 = vadd.f32 %v70, %v71
    %vm73 = vcmask 122880
    %74 = vst.msk [vmem:[#allocation7] sm:$0x1] %vm73, %v72
    %vm79 = vcmask 1040384
    %v80 = vrot.slane %v43, 7
    %v81 = vrot.slane %v44, 7
    %v82 = vsel %vm79, %v80, %v81
    %v83 = vrot.slane %v45, 7
    %v84 = vrot.slane %v46, 7
    %v85 = vsel %vm79, %v83, %v84
    %v90 = vsel %vm79, %v43, %v80
    %v91 = vsel %vm79, %v45, %v83
    %vm92 = vcmask 1046528
    %v93 = vrot.slane %v43, 1
    %v94 = vrot.slane %v44, 1
    %v95 = vsel %vm92, %v93, %v94
    %v96 = vrot.slane %v45, 1
    %v97 = vrot.slane %v46, 1
    %v98 = vsel %vm92, %v96, %v97
    %v103 = vsel %vm92, %v94, %v44
    %v104 = vsel %vm92, %v97, %v46
    %105 = vrot.lane.b32.xlu0 %v43, 1
    %v106 = vpop.permute.xlu0 %105
    %107 = vrot.lane.b32.xlu0 %v44, 1
    %v108 = vpop.permute.xlu0 %107
    %109 = vrot.lane.b32.xlu0 %v45, 1
    %v110 = vpop.permute.xlu0 %109
    %111 = vrot.lane.b32.xlu0 %v46, 1
    %v112 = vpop.permute.xlu0 %111
    %vm117 = vcmask 7168
    %v118 = vsel %vm117, %v43, %v106
    %v119 = vsel %vm117, %v44, %v108
    %v120 = vsel %vm117, %v45, %v110
    %v121 = vsel %vm117, %v46, %v112
    %122 = vrot.lane.b32.xlu0 %v43, 127
    %v123 = vpop.permute.xlu0 %122
    %124 = vrot.lane.b32.xlu0 %v44, 127
    %v125 = vpop.permute.xlu0 %124
    %126 = vrot.lane.b32.xlu0 %v45, 127
    %v127 = vpop.permute.xlu0 %126
    %128 = vrot.lane.b32.xlu0 %v46, 127
    %v129 = vpop.permute.xlu0 %128
    %vm134 = vcmask 121856
    %v135 = vsel %vm134, %v123, %v43
    %v136 = vsel %vm134, %v125, %v44
    %v137 = vsel %vm134, %v127, %v45
    %v138 = vsel %vm134, %v129, %v46
    %v139 = vsub.f32 %v135, %v118
    %v140 = vsub.f32 %v136, %v119
    %v141 = vsub.f32 %v137, %v120
    %v142 = vsub.f32 %v138, %v121
    %v147 = vrot.slane %v139, 7
    %v148 = vrot.slane %v140, 7
    %v149 = vsel %vm79, %v147, %v148
    %v150 = vrot.slane %v141, 7
    %v151 = vrot.slane %v142, 7
    %v152 = vsel %vm79, %v150, %v151
    %v157 = vsel %vm79, %v139, %v147
    %v158 = vsel %vm79, %v141, %v150
    %v159 = vmul.f32 %v139, 2.0
    %v160 = vmul.f32 %v140, 2.0
    %v161 = vmul.f32 %v141, 2.0
    %v162 = vmul.f32 %v142, 2.0
    %v163 = vadd.f32 %v157, %v159
    %v164 = vadd.f32 %v149, %v160
    %v165 = vadd.f32 %v158, %v161
    %v166 = vadd.f32 %v152, %v162
    %v167 = vrot.slane %v139, 1
    %v168 = vrot.slane %v140, 1
    %v169 = vsel %vm92, %v167, %v168
    %v170 = vrot.slane %v141, 1
    %v171 = vrot.slane %v142, 1
    %v172 = vsel %vm92, %v170, %v171
    %v177 = vsel %vm92, %v168, %v140
    %v178 = vsel %vm92, %v171, %v142
    %v179 = vadd.f32 %v163, %v169
    %v180 = vadd.f32 %v164, %v177
    %v181 = vadd.f32 %v165, %v172
    %v182 = vadd.f32 %v166, %v178
    %v183 = vmul.f32 %v179, 0.125
    %v184 = vmul.f32 %v180, 0.125
    %v185 = vmul.f32 %v181, 0.125
    %v186 = vmul.f32 %v182, 0.125
    %v187 = vsub.f32 %v95, %v90
    %v188 = vsub.f32 %v103, %v82
    %v189 = vsub.f32 %v98, %v91
    %v190 = vsub.f32 %v104, %v85
    %195 = vrot.lane.b32.xlu0 %v187, 1
    %v196 = vpop.permute.xlu0 %195
    %197 = vrot.lane.b32.xlu0 %v188, 1
    %v198 = vpop.permute.xlu0 %197
    %199 = vrot.lane.b32.xlu0 %v189, 1
    %v200 = vpop.permute.xlu0 %199
    %201 = vrot.lane.b32.xlu0 %v190, 1
    %v202 = vpop.permute.xlu0 %201
    %v207 = vsel %vm117, %v187, %v196
    %v208 = vsel %vm117, %v188, %v198
    %v209 = vsel %vm117, %v189, %v200
    %v210 = vsel %vm117, %v190, %v202
    %v211 = vmul.f32 %v187, 2.0
    %v212 = vmul.f32 %v188, 2.0
    %v213 = vmul.f32 %v189, 2.0
    %v214 = vmul.f32 %v190, 2.0
    %v215 = vadd.f32 %v207, %v211
    %v216 = vadd.f32 %v208, %v212
    %v217 = vadd.f32 %v209, %v213
    %v218 = vadd.f32 %v210, %v214
    %219 = vrot.lane.b32.xlu0 %v187, 127
    %v220 = vpop.permute.xlu0 %219
    %221 = vrot.lane.b32.xlu0 %v188, 127
    %v222 = vpop.permute.xlu0 %221
    %223 = vrot.lane.b32.xlu0 %v189, 127
    %v224 = vpop.permute.xlu0 %223
    %225 = vrot.lane.b32.xlu0 %v190, 127
    %v226 = vpop.permute.xlu0 %225
    %v231 = vsel %vm134, %v220, %v187
    %v232 = vsel %vm134, %v222, %v188
    %v233 = vsel %vm134, %v224, %v189
    %v234 = vsel %vm134, %v226, %v190
    %v235 = vadd.f32 %v215, %v231
    %v236 = vadd.f32 %v216, %v232
    %v237 = vadd.f32 %v217, %v233
    %v238 = vadd.f32 %v218, %v234
    %v239 = vmul.f32 %v235, 0.125
    %v240 = vmul.f32 %v236, 0.125
    %v241 = vmul.f32 %v237, 0.125
    %v242 = vmul.f32 %v238, 0.125
    %v243 = vmul.f32 %v183, %v183
    %v244 = vmul.f32 %v184, %v184
    %v245 = vmul.f32 %v185, %v185
    %v246 = vmul.f32 %v186, %v186
    %v247 = vmul.f32 %v239, %v239
    %v248 = vmul.f32 %v240, %v240
    %v249 = vmul.f32 %v241, %v241
    %v250 = vmul.f32 %v242, %v242
    %v251 = vadd.f32 %v243, %v247
    %v252 = vadd.f32 %v244, %v248
    %v253 = vadd.f32 %v245, %v249
    %v254 = vadd.f32 %v246, %v250
    %v255 = vadd.f32 %v251, 1e-06
    %v256 = vadd.f32 %v252, 1e-06
    %v257 = vadd.f32 %v253, 1e-06
    %v258 = vadd.f32 %v254, 1e-06
    %v259 = vrsqrt.pop %v255
    %v260 = vmul.f32 %v255, %v259
    %vm261 = vcmp.eq.f32.partialorder %v255, inf
    %v262 = vsel %vm261, %v255, %v260
    %vm263 = vcmp.eq.f32.partialorder %v255, 0.0
    %v264 = vand.u32 %v255, 2147483648
    %v265 = vsel %vm263, %v264, %v262
    %v266 = vrsqrt.pop %v256
    %v267 = vmul.f32 %v256, %v266
    %vm268 = vcmp.eq.f32.partialorder %v256, inf
    %v269 = vsel %vm268, %v256, %v267
    %vm270 = vcmp.eq.f32.partialorder %v256, 0.0
    %v271 = vand.u32 %v256, 2147483648
    %v272 = vsel %vm270, %v271, %v269
    %v273 = vrsqrt.pop %v257
    %v274 = vmul.f32 %v257, %v273
    %vm275 = vcmp.eq.f32.partialorder %v257, inf
    %v276 = vsel %vm275, %v257, %v274
    %vm277 = vcmp.eq.f32.partialorder %v257, 0.0
    %v278 = vand.u32 %v257, 2147483648
    %v279 = vsel %vm277, %v278, %v276
    %v280 = vrsqrt.pop %v258
    %v281 = vmul.f32 %v258, %v280
    %vm282 = vcmp.eq.f32.partialorder %v258, inf
    %v283 = vsel %vm282, %v258, %v281
    %vm284 = vcmp.eq.f32.partialorder %v258, 0.0
    %v285 = vand.u32 %v258, 2147483648
    %v286 = vsel %vm284, %v285, %v283
    %v291 = vrot.slane %v47, 7
    %v292 = vrot.slane %v48, 7
    %v293 = vsel %vm79, %v291, %v292
    %v294 = vrot.slane %v49, 7
    %v295 = vrot.slane %v50, 7
    %v296 = vsel %vm79, %v294, %v295
    %v301 = vsel %vm79, %v47, %v291
    %v302 = vsel %vm79, %v49, %v294
    %v303 = vrot.slane %v47, 1
    %v304 = vrot.slane %v48, 1
    %v305 = vsel %vm92, %v303, %v304
    %v306 = vrot.slane %v49, 1
    %v307 = vrot.slane %v50, 1
    %v308 = vsel %vm92, %v306, %v307
    %v313 = vsel %vm92, %v304, %v48
    %v314 = vsel %vm92, %v307, %v50
    %315 = vrot.lane.b32.xlu0 %v47, 1
    %v316 = vpop.permute.xlu0 %315
    %317 = vrot.lane.b32.xlu0 %v48, 1
    %v318 = vpop.permute.xlu0 %317
    %319 = vrot.lane.b32.xlu0 %v49, 1
    %v320 = vpop.permute.xlu0 %319
    %321 = vrot.lane.b32.xlu0 %v50, 1
    %v322 = vpop.permute.xlu0 %321
    %v327 = vsel %vm117, %v47, %v316
    %v328 = vsel %vm117, %v48, %v318
    %v329 = vsel %vm117, %v49, %v320
    %v330 = vsel %vm117, %v50, %v322
    %331 = vrot.lane.b32.xlu0 %v47, 127
    %v332 = vpop.permute.xlu0 %331
    %333 = vrot.lane.b32.xlu0 %v48, 127
    %v334 = vpop.permute.xlu0 %333
    %335 = vrot.lane.b32.xlu0 %v49, 127
    %v336 = vpop.permute.xlu0 %335
    %337 = vrot.lane.b32.xlu0 %v50, 127
    %v338 = vpop.permute.xlu0 %337
    %v343 = vsel %vm134, %v332, %v47
    %v344 = vsel %vm134, %v334, %v48
    %v345 = vsel %vm134, %v336, %v49
    %v346 = vsel %vm134, %v338, %v50
    %v347 = vsub.f32 %v343, %v327
    %v348 = vsub.f32 %v344, %v328
    %v349 = vsub.f32 %v345, %v329
    %v350 = vsub.f32 %v346, %v330
    %v355 = vrot.slane %v347, 7
    %v356 = vrot.slane %v348, 7
    %v357 = vsel %vm79, %v355, %v356
    %v358 = vrot.slane %v349, 7
    %v359 = vrot.slane %v350, 7
    %v360 = vsel %vm79, %v358, %v359
    %v365 = vsel %vm79, %v347, %v355
    %v366 = vsel %vm79, %v349, %v358
    %v367 = vmul.f32 %v347, 2.0
    %v368 = vmul.f32 %v348, 2.0
    %v369 = vmul.f32 %v349, 2.0
    %v370 = vmul.f32 %v350, 2.0
    %v371 = vadd.f32 %v365, %v367
    %v372 = vadd.f32 %v357, %v368
    %v373 = vadd.f32 %v366, %v369
    %v374 = vadd.f32 %v360, %v370
    %v375 = vrot.slane %v347, 1
    %v376 = vrot.slane %v348, 1
    %v377 = vsel %vm92, %v375, %v376
    %v378 = vrot.slane %v349, 1
    %v379 = vrot.slane %v350, 1
    %v380 = vsel %vm92, %v378, %v379
    %v385 = vsel %vm92, %v376, %v348
    %v386 = vsel %vm92, %v379, %v350
    %v387 = vadd.f32 %v371, %v377
    %v388 = vadd.f32 %v372, %v385
    %v389 = vadd.f32 %v373, %v380
    %v390 = vadd.f32 %v374, %v386
    %v391 = vmul.f32 %v387, 0.125
    %v392 = vmul.f32 %v388, 0.125
    %v393 = vmul.f32 %v389, 0.125
    %v394 = vmul.f32 %v390, 0.125
    %v395 = vsub.f32 %v305, %v301
    %v396 = vsub.f32 %v313, %v293
    %v397 = vsub.f32 %v308, %v302
    %v398 = vsub.f32 %v314, %v296
    %403 = vrot.lane.b32.xlu0 %v395, 1
    %v404 = vpop.permute.xlu0 %403
    %405 = vrot.lane.b32.xlu0 %v396, 1
    %v406 = vpop.permute.xlu0 %405
    %407 = vrot.lane.b32.xlu0 %v397, 1
    %v408 = vpop.permute.xlu0 %407
    %409 = vrot.lane.b32.xlu0 %v398, 1
    %v410 = vpop.permute.xlu0 %409
    %v415 = vsel %vm117, %v395, %v404
    %v416 = vsel %vm117, %v396, %v406
    %v417 = vsel %vm117, %v397, %v408
    %v418 = vsel %vm117, %v398, %v410
    %v419 = vmul.f32 %v395, 2.0
    %v420 = vmul.f32 %v396, 2.0
    %v421 = vmul.f32 %v397, 2.0
    %v422 = vmul.f32 %v398, 2.0
    %v423 = vadd.f32 %v415, %v419
    %v424 = vadd.f32 %v416, %v420
    %v425 = vadd.f32 %v417, %v421
    %v426 = vadd.f32 %v418, %v422
    %427 = vrot.lane.b32.xlu0 %v395, 127
    %v428 = vpop.permute.xlu0 %427
    %429 = vrot.lane.b32.xlu0 %v396, 127
    %v430 = vpop.permute.xlu0 %429
    %431 = vrot.lane.b32.xlu0 %v397, 127
    %v432 = vpop.permute.xlu0 %431
    %433 = vrot.lane.b32.xlu0 %v398, 127
    %v434 = vpop.permute.xlu0 %433
    %v439 = vsel %vm134, %v428, %v395
    %v440 = vsel %vm134, %v430, %v396
    %v441 = vsel %vm134, %v432, %v397
    %v442 = vsel %vm134, %v434, %v398
    %v443 = vadd.f32 %v423, %v439
    %v444 = vadd.f32 %v424, %v440
    %v445 = vadd.f32 %v425, %v441
    %v446 = vadd.f32 %v426, %v442
    %v447 = vmul.f32 %v443, 0.125
    %v448 = vmul.f32 %v444, 0.125
    %v449 = vmul.f32 %v445, 0.125
    %v450 = vmul.f32 %v446, 0.125
    %v451 = vmul.f32 %v391, %v391
    %v452 = vmul.f32 %v392, %v392
    %v453 = vmul.f32 %v393, %v393
    %v454 = vmul.f32 %v394, %v394
    %v455 = vmul.f32 %v447, %v447
    %v456 = vmul.f32 %v448, %v448
    %v457 = vmul.f32 %v449, %v449
    %v458 = vmul.f32 %v450, %v450
    %v459 = vadd.f32 %v451, %v455
    %v460 = vadd.f32 %v452, %v456
    %v461 = vadd.f32 %v453, %v457
    %v462 = vadd.f32 %v454, %v458
    %v463 = vadd.f32 %v459, 1e-06
    %v464 = vadd.f32 %v460, 1e-06
    %v465 = vadd.f32 %v461, 1e-06
    %v466 = vadd.f32 %v462, 1e-06
    %v467 = vrsqrt.pop %v463
    %v468 = vmul.f32 %v463, %v467
    %vm469 = vcmp.eq.f32.partialorder %v463, inf
    %v470 = vsel %vm469, %v463, %v468
    %vm471 = vcmp.eq.f32.partialorder %v463, 0.0
    %v472 = vand.u32 %v463, 2147483648
    %v473 = vsel %vm471, %v472, %v470
    %v474 = vrsqrt.pop %v464
    %v475 = vmul.f32 %v464, %v474
    %vm476 = vcmp.eq.f32.partialorder %v464, inf
    %v477 = vsel %vm476, %v464, %v475
    %vm478 = vcmp.eq.f32.partialorder %v464, 0.0
    %v479 = vand.u32 %v464, 2147483648
    %v480 = vsel %vm478, %v479, %v477
    %v481 = vrsqrt.pop %v465
    %v482 = vmul.f32 %v465, %v481
    %vm483 = vcmp.eq.f32.partialorder %v465, inf
    %v484 = vsel %vm483, %v465, %v482
    %vm485 = vcmp.eq.f32.partialorder %v465, 0.0
    %v486 = vand.u32 %v465, 2147483648
    %v487 = vsel %vm485, %v486, %v484
    %v488 = vrsqrt.pop %v466
    %v489 = vmul.f32 %v466, %v488
    %vm490 = vcmp.eq.f32.partialorder %v466, inf
    %v491 = vsel %vm490, %v466, %v489
    %vm492 = vcmp.eq.f32.partialorder %v466, 0.0
    %v493 = vand.u32 %v466, 2147483648
    %v494 = vsel %vm492, %v493, %v491
    %v495 = vsub.f32 %v265, %v473
    %v496 = vsub.f32 %v272, %v480
    %v497 = vsub.f32 %v279, %v487
    %v498 = vsub.f32 %v286, %v494
    %v499 = vand.u32 2147483647, %v495
    %v500 = vand.u32 2147483647, %v496
    %v501 = vand.u32 2147483647, %v497
    %v502 = vand.u32 2147483647, %v498
    %v503 = vsel %vm59, %v499, 0.0
    %v504 = vsel %vm59, %v500, 0.0
    %v505 = vadd.f32 %v503, %v504
    %v506 = vsel %vm59, %v501, 0.0
    %v507 = vadd.f32 %v505, %v506
    %v508 = vsel %vm59, %v502, 0.0
    %v509 = vadd.f32 %v507, %v508
    %v510 = vrot.slane %v509, 4
    %v511 = vadd.f32 %v509, %v510
    %v512 = vrot.slane %v511, 2
    %v513 = vadd.f32 %v511, %v512
    %v514 = vrot.slane %v513, 1
    %v515 = vadd.f32 %v513, %v514
    %516 = vst.msk [vmem:[#allocation8] sm:$0x1] %vm73, %v515
    // Predicated region
    $region18: #{tpu_custom_call.1} parent=1 // pred_check
      _
    $region19: #{tpu_custom_call.1} parent=1 // pred_check_branch
      %518 = sbr.rel (0) target = $region21
    $region20: #{tpu_custom_call.1} parent=1 // pred_region
      %s520 = ssub.s32 16, 16
      %521 = vsyncadd [#allocation4], %s520
      %s523 = sshll.u32 [#allocation7], 4
      %s524 = int_to_ptr.vmem [resolvable:$true] %s523
      %526 = dma.vmem_to_hbm [thread:$0]  %s524, 16, %s2, [#allocation4]
    $region21: #{tpu_custom_call.1} parent=1 // pred_fallthru
      _
    // Predicated region
    $region22: #{tpu_custom_call.1} parent=1 // pred_check
      _
    $region23: #{tpu_custom_call.1} parent=1 // pred_check_branch
      %528 = sbr.rel (0) target = $region25
    $region24: #{tpu_custom_call.1} parent=1 // pred_region
      %s530 = ssub.s32 16, 16
      %531 = vsyncadd [#allocation9], %s530
      %s533 = sshll.u32 [#allocation8], 4
      %s534 = int_to_ptr.vmem [resolvable:$true] %s533
      %536 = dma.vmem_to_hbm [thread:$0]  %s534, 16, %s3, [#allocation9]
    $region25: #{tpu_custom_call.1} parent=1 // pred_fallthru
      _
    // Predicated region
    $region26: #{tpu_custom_call.1} parent=1 // pred_check
      _
    $region27: #{tpu_custom_call.1} parent=1 // pred_check_branch
      %538 = sbr.rel (0) target = $region29
    $region28: #{tpu_custom_call.1} parent=1 // pred_region
      %539 = dma.done [#allocation4], 16
    $region29: #{tpu_custom_call.1} parent=1 // pred_fallthru
      _
    // Predicated region
    $region30: #{tpu_custom_call.1} parent=1 // pred_check
      _
    $region31: #{tpu_custom_call.1} parent=1 // pred_check_branch
      %541 = sbr.rel (0) target = $region33
    $region32: #{tpu_custom_call.1} parent=1 // pred_region
      %542 = dma.done [#allocation9], 16
    $region33: #{tpu_custom_call.1} parent=1 // pred_fallthru
      _
    %543 = vsyncpa [#allocation3], 1
    %544 = vsyncpa [#allocation6], 1
    %545 = vsyncpa [#allocation4], 1
    %546 = vsyncpa [#allocation9], 1

</llo_original>
